<compile_context>
chip_gen: v7x
topology: tpu7x:2x2x1
jax: 0.10.0
libtpu: 0.0.40
codegen_flags: <defaults>
</compile_context>

<pallas_src>
import jax
import jax.numpy as jnp
from jax import lax
from jax.experimental import pallas as pl
from jax.experimental.pallas import tpu as pltpu

_LANES = 128      # vreg lane width
_TH_MAX = 8192    # max sublane rows per row tile (f32 pair: 8 MiB / step)
_N_ROWS = 8       # stat rows per slab (7 used + 1 pad for (8,128) alignment)
_GAMMA = 3        # FocalLoss gamma (self.alpha=0.25 is unused in forward)
_EPS = 1e-12      # dice eps


def _round_up(a, m):
    return (a + m - 1) // m * m


def _stats_slab(x, t, valid, red_axis):
    """Per-lane statistics of one tile (x, t already zeroed where ~valid).

    Stat rows along `red_axis`:
      0 min(pred)  1 max(pred)  2 sum(pred)  3 sum(pred*t)
      4 sum(t)     5 sum(fl)    6 sum(fl*t)  7 zero
    """
    # sigmoid + stable BCE-with-logits sharing one exp / log / reciprocal
    e = jnp.exp(-jnp.abs(x))
    den = 1.0 + e
    r0 = pl.reciprocal(den, approx=True)
    recip = r0 * (2.0 - den * r0)                 # one Newton step -> f32
    pred = jnp.where(x >= 0.0, recip, e * recip)  # sigmoid(x)

    ce = jnp.maximum(x, 0.0) - x * t + jnp.log(den)
    pt = jnp.where(t == 1.0, pred, 1.0 - pred)
    om = 1.0 - pt
    fl = om * om * om * ce                        # (1 - pt)**3 * ce

    if valid is None:
        pred_min = pred_max = pred_sum = pred
        fl_sum = fl
    else:
        # x==0 / t==0 in the masked region -> only pred/fl stats need re-mask
        pred_min = jnp.where(valid, pred, jnp.inf)
        pred_max = jnp.where(valid, pred, -jnp.inf)
        pred_sum = jnp.where(valid, pred, 0.0)
        fl_sum = jnp.where(valid, fl, 0.0)

    kw = dict(axis=red_axis, keepdims=True)
    rows = [
        jnp.min(pred_min, **kw), jnp.max(pred_max, **kw),
        jnp.sum(pred_sum, **kw), jnp.sum(pred * t, **kw),
        jnp.sum(t, **kw), jnp.sum(fl_sum, **kw), jnp.sum(fl * t, **kw),
    ]
    rows.append(jnp.zeros_like(rows[0]))
    return jnp.concatenate(rows, axis=red_axis)


def _make_row_kernel(n_valid, th, n_r, needs_mask):
    """Row-tiled kernel: one (th,128) tile per (batch, row-tile) grid point."""

    def kernel(x_ref, t_ref, o_ref):
        x = x_ref[0].astype(jnp.float32)     # (th, 128)
        t = t_ref[0].astype(jnp.float32)

        if needs_mask:
            r = pl.program_id(1)

            def masked(x, t, r):
                rows = lax.broadcasted_iota(jnp.int32, (th, _LANES), 0)
                lanes = lax.broadcasted_iota(jnp.int32, (th, _LANES), 1)
                gidx = (r * th + rows) * _LANES + lanes
                valid = gidx < n_valid
                x = jnp.where(valid, x, 0.0)
                t = jnp.where(valid, t, 0.0)
                return _stats_slab(x, t, valid, 0)

            def unmasked(x, t, r):
                return _stats_slab(x, t, None, 0)

            # mask arithmetic only runs on the (single) ragged final tile
            slab = lax.cond(r == n_r - 1, masked, unmasked, x, t, r)
        else:
            slab = _stats_slab(x, t, None, 0)

        o_ref[0, 0] = slab                   # single full-block store

    return kernel


def _make_batch_kernel(n_valid, r_rows, needs_mask):
    """Batch-tiled kernel for small masks: (Bt, R, 128) per grid step."""

    def kernel(x_ref, t_ref, o_ref):
        x = x_ref[...].astype(jnp.float32)   # (Bt, R, 128)
        t = t_ref[...].astype(jnp.float32)

        if needs_mask:                       # only when H*W % 128 != 0
            rows = lax.broadcasted_iota(jnp.int32, (r_rows, _LANES), 0)
            lanes = lax.broadcasted_iota(jnp.int32, (r_rows, _LANES), 1)
            valid = ((rows * _LANES + lanes) < n_valid)[None]   # (1,R,128)
            x = jnp.where(valid, x, 0.0)
            t = jnp.where(valid, t, 0.0)
            slab = _stats_slab(x, t, valid, 1)
        else:
            slab = _stats_slab(x, t, None, 1)

        o_ref[:, 0, :, :] = slab             # single full-block store

    return kernel


def main_loss(mask_logit, mask_gt, wmask=None, *, tile_rows_max=_TH_MAX):
    """JAX/Pallas equivalent of main_loss.forward -> {'ce_loss', 'dc_loss'}."""
    gt = mask_gt
    if gt.ndim == mask_logit.ndim + 1 and gt.shape[-1] == 1:
        gt = jnp.squeeze(gt, axis=-1)        # mirrors .squeeze(-1)

    B, H, W = mask_logit.shape
    N = H * W

    # dtype policy: never widen in the wrapper.  f32/bf16 pass straight
    # through (cast happens in-kernel); bool/int binary masks -> bf16 (exact).
    x = mask_logit
    if x.dtype not in (jnp.float32, jnp.bfloat16):
        x = x.astype(jnp.float32)
    t = gt
    if t.dtype not in (jnp.float32, jnp.bfloat16):
        t = t.astype(jnp.bfloat16)

    # lane-dense view (B, R, 128); pad (< 128 elems) only if N % 128 != 0
    R = pl.cdiv(N, _LANES)
    N_pad = R * _LANES
    x2 = x.reshape(B, N)
    t2 = t.reshape(B, N)
    if N_pad != N:
        x2 = jnp.pad(x2, ((0, 0), (0, N_pad - N)))
        t2 = jnp.pad(t2, ((0, 0), (0, N_pad - N)))
    x3 = x2.reshape(B, R, _LANES)
    t3 = t2.reshape(B, R, _LANES)

    pair_bytes = x.dtype.itemsize + t.dtype.itemsize
    n_tiles = pl.cdiv(R, tile_rows_max)

    if n_tiles == 1:
        # ---- small masks: pack several batches per grid step ----
        bt = max(1, min(B, tile_rows_max // max(R, 1)))
        n_b = pl.cdiv(B, bt)
        needs_mask = (N_pad != N)
        vmem = min(max(2 * bt * R * _LANES * pair_bytes + (4 << 20), 16 << 20),
                   60 << 20)
        stats = pl.pallas_call(
            _make_batch_kernel(N, R, needs_mask),
            out_shape=jax.ShapeDtypeStruct((B, 1, _N_ROWS, _LANES),
                                           jnp.float32),
            grid=(n_b,),
            in_specs=[
                pl.BlockSpec((bt, R, _LANES), lambda i: (i, 0, 0)),
                pl.BlockSpec((bt, R, _LANES), lambda i: (i, 0, 0)),
            ],
            out_specs=pl.BlockSpec((bt, 1, _N_ROWS, _LANES),
                                   lambda i: (i, 0, 0, 0)),
            compiler_params=pltpu.CompilerParams(
                dimension_semantics=("parallel",),
                vmem_limit_bytes=int(vmem)),
        )(x3, t3)
    else:
        # ---- large masks: balanced row tiles, both grid axes parallel ----
        th = _round_up(pl.cdiv(R, n_tiles), 8)
        n_r = pl.cdiv(R, th)
        needs_mask = (n_r * th * _LANES != N)
        vmem = min(max(2 * th * _LANES * pair_bytes + (4 << 20), 16 << 20),
                   60 << 20)
        stats = pl.pallas_call(
            _make_row_kernel(N, th, n_r, needs_mask),
            out_shape=jax.ShapeDtypeStruct((B, n_r, _N_ROWS, _LANES),
                                           jnp.float32),
            grid=(B, n_r),
            in_specs=[
                pl.BlockSpec((1, th, _LANES), lambda b, r: (b, r, 0)),
                pl.BlockSpec((1, th, _LANES), lambda b, r: (b, r, 0)),
            ],
            out_specs=pl.BlockSpec((1, 1, _N_ROWS, _LANES),
                                   lambda b, r: (b, r, 0, 0)),
            compiler_params=pltpu.CompilerParams(
                dimension_semantics=("parallel", "parallel"),
                vmem_limit_bytes=int(vmem)),
        )(x3, t3)

    # tiny final cross-slot / cross-lane reductions in plain JAX
    mn = jnp.min(stats[:, :, 0, :], axis=(1, 2))
    mx = jnp.max(stats[:, :, 1, :], axis=(1, 2))
    s_pred = jnp.sum(stats[:, :, 2, :], axis=(1, 2))
    s_pg = jnp.sum(stats[:, :, 3, :], axis=(1, 2))
    s_gt = jnp.sum(stats[:, :, 4, :], axis=(1, 2))
    s_fl = jnp.sum(stats[:, :, 5, :], axis=(1, 2))
    s_flp = jnp.sum(stats[:, :, 6, :], axis=(1, 2))
    s_fln = s_fl - s_flp

    n_total = float(B * N)
    hw = float(N)

    # --- FocalLoss (binary mask: count(gt>0) == sum(gt), fl*gt == fl*[gt>0])
    frac_pos = jnp.sum(s_gt) / n_total
    pos_w = 1.0 - frac_pos
    neg_w = frac_pos
    focal = (pos_w * jnp.sum(s_flp) + neg_w * jnp.sum(s_fln)) / n_total

    # --- Dice coefficient loss: pred_norm = (pred - min)/(max - min), sums
    #     rewritten from the kernel stats (matches reference semantics,
    #     including Inf/NaN for a constant prediction).
    denom = mx - mn
    inter = (s_pg - mn * s_gt) / denom
    union = _EPS + (s_pred - mn * hw) / denom + s_gt
    dice = jnp.mean(1.0 - 2.0 * inter / union)

    return {'ce_loss': focal, 'dc_loss': dice}


# -------------------- pure-JAX reference (for validation) --------------------
def _reference(mask_logit, mask_gt):
    gt = jnp.squeeze(mask_gt, axis=-1).astype(jnp.float32)
    x = mask_logit.astype(jnp.float32)

    xf = x.reshape(-1)
    tf = gt.reshape(-1)
    tw = jnp.where(tf > 0.0, 1.0, 0.0)
    neg_w = jnp.sum(tw) / tf.shape[0]
    pos_w = 1.0 - neg_w
    alpha = jnp.where(tw > 0.0, pos_w, neg_w)
    pred = 1.0 / (1.0 + jnp.exp(-xf))
    ce = jnp.maximum(xf, 0.0) - xf * tf + jnp.log(1.0 + jnp.exp(-jnp.abs(xf)))
    pt = jnp.where(tf == 1.0, pred, 1.0 - pred)
    focal = jnp.mean(alpha * (1.0 - pt) ** _GAMMA * ce)

    p = 1.0 / (1.0 + jnp.exp(-x))
    p = p - jnp.min(p, axis=(1, 2), keepdims=True)
    p = p / jnp.max(p, axis=(1, 2), keepdims=True)
    inter = jnp.sum(p * gt, axis=(1, 2))
    union = _EPS + jnp.sum(p, axis=(1, 2)) + jnp.sum(gt, axis=(1, 2))
    dice = jnp.mean(1.0 - 2.0 * inter / union)
    return {'ce_loss': focal, 'dc_loss': dice}


if __name__ == "__main__":
    key = jax.random.PRNGKey(0)
    k1, k2, k3, k4 = jax.random.split(key, 4)

    # case 1: small image -> batch-tiled path, no padding, f32 gt
    B, H, W = 2, 16, 16
    logit1 = jax.random.normal(k1, (B, H, W), dtype=jnp.float32)
    gt1 = (jax.random.uniform(k2, (B, H, W, 1)) < 0.3).astype(jnp.float32)
    out1 = main_loss(logit1, gt1)
    out1 = {k: jax.block_until_ready(v) for k, v in out1.items()}
    ref1 = _reference(logit1, gt1)
    assert jnp.allclose(out1['ce_loss'], ref1['ce_loss'], rtol=2e-4, atol=1e-5), \
        (out1['ce_loss'], ref1['ce_loss'])
    assert jnp.allclose(out1['dc_loss'], ref1['dc_loss'], rtol=2e-4, atol=1e-5), \
        (out1['dc_loss'], ref1['dc_loss'])

    # case 2: ragged H*W, odd batch, bool gt, tiny tile cap -> exercises the
    # row-tiled kernel, its lax.cond-gated tail mask, and the bf16 gt path
    B, H, W = 3, 36, 36                      # N = 1296 (not a multiple of 128)
    logit2 = jax.random.normal(k3, (B, H, W), dtype=jnp.float32)
    gt2 = jax.random.uniform(k4, (B, H, W, 1)) < 0.3    # bool mask
    out2 = main_loss(logit2, gt2, tile_rows_max=8)
    out2 = {k: jax.block_until_ready(v) for k, v in out2.items()}
    ref2 = _reference(logit2, gt2)
    assert jnp.allclose(out2['ce_loss'], ref2['ce_loss'], rtol=2e-4, atol=1e-5), \
        (out2['ce_loss'], ref2['ce_loss'])
    assert jnp.allclose(out2['dc_loss'], ref2['dc_loss'], rtol=2e-4, atol=1e-5), \
        (out2['dc_loss'], ref2['dc_loss'])

    print("KERNEL_OK")
</pallas_src>

<mosaic_0001>
module attributes {stable_mosaic.version = 11 : i64} {
  func.func @kernel(%arg0: i32, %arg1: memref<2x2x128xf32, #tpu.memory_space<vmem>>, %arg2: memref<2x2x128xf32, #tpu.memory_space<vmem>>, %arg3: memref<2x1x8x128xf32, #tpu.memory_space<vmem>>) attributes {dimension_semantics = [#tpu.dimension_semantics<parallel>], iteration_bounds = array<i64: 1>, scalar_prefetch = 0 : i64, scratch_operands = 0 : i64, tpu.core_type = #tpu.core_type<tc>, window_params = [{transform_indices = @transform_0, window_bounds = array<i64: 2, 2, 128>}, {transform_indices = @transform_1, window_bounds = array<i64: 2, 2, 128>}, {transform_indices = @transform_2, window_bounds = array<i64: 2, 1, 8, 128>}]} {
    %c0 = arith.constant 0 : index
    %c0_0 = arith.constant 0 : index
    %c0_1 = arith.constant 0 : index
    %0 = vector.load %arg1[%c0, %c0_0, %c0_1] : memref<2x2x128xf32, #tpu.memory_space<vmem>>, vector<2x2x128xf32>
    %c0_2 = arith.constant 0 : index
    %c0_3 = arith.constant 0 : index
    %c0_4 = arith.constant 0 : index
    %1 = vector.load %arg2[%c0_2, %c0_3, %c0_4] : memref<2x2x128xf32, #tpu.memory_space<vmem>>, vector<2x2x128xf32>
    %2 = math.absf %0 : vector<2x2x128xf32>
    %cst = arith.constant 0.000000e+00 : f32
    %3 = vector.broadcast %cst : f32 to vector<2x2x128xf32>
    %4 = arith.subf %3, %2 : vector<2x2x128xf32>
    %5 = math.exp %4 : vector<2x2x128xf32>
    %cst_5 = arith.constant 1.000000e+00 : f32
    %6 = vector.broadcast %cst_5 : f32 to vector<2x2x128xf32>
    %7 = arith.addf %6, %5 : vector<2x2x128xf32>
    %8 = tpu.reciprocal %7 {approx = true} : vector<2x2x128xf32> -> vector<2x2x128xf32>
    %9 = arith.mulf %7, %8 : vector<2x2x128xf32>
    %cst_6 = arith.constant 2.000000e+00 : f32
    %10 = vector.broadcast %cst_6 : f32 to vector<2x2x128xf32>
    %11 = arith.subf %10, %9 : vector<2x2x128xf32>
    %12 = arith.mulf %8, %11 : vector<2x2x128xf32>
    %cst_7 = arith.constant 0.000000e+00 : f32
    %13 = vector.broadcast %cst_7 : f32 to vector<2x2x128xf32>
    %14 = arith.cmpf oge, %0, %13 : vector<2x2x128xf32>
    %15 = arith.mulf %5, %12 : vector<2x2x128xf32>
    %16 = arith.select %14, %12, %15 : vector<2x2x128xi1>, vector<2x2x128xf32>
    %cst_8 = arith.constant 0.000000e+00 : f32
    %17 = vector.broadcast %cst_8 : f32 to vector<2x2x128xf32>
    %18 = arith.maximumf %0, %17 : vector<2x2x128xf32>
    %19 = arith.mulf %0, %1 : vector<2x2x128xf32>
    %20 = arith.subf %18, %19 : vector<2x2x128xf32>
    %21 = math.log %7 : vector<2x2x128xf32>
    %22 = arith.addf %20, %21 : vector<2x2x128xf32>
    %cst_9 = arith.constant 1.000000e+00 : f32
    %23 = vector.broadcast %cst_9 : f32 to vector<2x2x128xf32>
    %24 = arith.cmpf oeq, %1, %23 : vector<2x2x128xf32>
    %cst_10 = arith.constant 1.000000e+00 : f32
    %25 = vector.broadcast %cst_10 : f32 to vector<2x2x128xf32>
    %26 = arith.subf %25, %16 : vector<2x2x128xf32>
    %27 = arith.select %24, %16, %26 : vector<2x2x128xi1>, vector<2x2x128xf32>
    %cst_11 = arith.constant 1.000000e+00 : f32
    %28 = vector.broadcast %cst_11 : f32 to vector<2x2x128xf32>
    %29 = arith.subf %28, %27 : vector<2x2x128xf32>
    %30 = arith.mulf %29, %29 : vector<2x2x128xf32>
    %31 = arith.mulf %30, %29 : vector<2x2x128xf32>
    %32 = arith.mulf %31, %22 : vector<2x2x128xf32>
    %cst_12 = arith.constant dense<0x7F800000> : vector<2x128xf32>
    %33 = vector.multi_reduction <minimumf>, %16, %cst_12 [1] : vector<2x2x128xf32> to vector<2x128xf32>
    %34 = vector.shape_cast %33 : vector<2x128xf32> to vector<2x1x128xf32>
    %cst_13 = arith.constant dense<0xFF800000> : vector<2x128xf32>
    %35 = vector.multi_reduction <maximumf>, %16, %cst_13 [1] : vector<2x2x128xf32> to vector<2x128xf32>
    %36 = vector.shape_cast %35 : vector<2x128xf32> to vector<2x1x128xf32>
    %cst_14 = arith.constant dense<0.000000e+00> : vector<2x128xf32>
    %37 = vector.multi_reduction <add>, %16, %cst_14 [1] : vector<2x2x128xf32> to vector<2x128xf32>
    %38 = vector.shape_cast %37 : vector<2x128xf32> to vector<2x1x128xf32>
    %39 = arith.mulf %16, %1 : vector<2x2x128xf32>
    %cst_15 = arith.constant dense<0.000000e+00> : vector<2x128xf32>
    %40 = vector.multi_reduction <add>, %39, %cst_15 [1] : vector<2x2x128xf32> to vector<2x128xf32>
    %41 = vector.shape_cast %40 : vector<2x128xf32> to vector<2x1x128xf32>
    %cst_16 = arith.constant dense<0.000000e+00> : vector<2x128xf32>
    %42 = vector.multi_reduction <add>, %1, %cst_16 [1] : vector<2x2x128xf32> to vector<2x128xf32>
    %43 = vector.shape_cast %42 : vector<2x128xf32> to vector<2x1x128xf32>
    %cst_17 = arith.constant dense<0.000000e+00> : vector<2x128xf32>
    %44 = vector.multi_reduction <add>, %32, %cst_17 [1] : vector<2x2x128xf32> to vector<2x128xf32>
    %45 = vector.shape_cast %44 : vector<2x128xf32> to vector<2x1x128xf32>
    %46 = arith.mulf %32, %1 : vector<2x2x128xf32>
    %cst_18 = arith.constant dense<0.000000e+00> : vector<2x128xf32>
    %47 = vector.multi_reduction <add>, %46, %cst_18 [1] : vector<2x2x128xf32> to vector<2x128xf32>
    %48 = vector.shape_cast %47 : vector<2x128xf32> to vector<2x1x128xf32>
    %cst_19 = arith.constant 0.000000e+00 : f32
    %49 = vector.broadcast %cst_19 : f32 to vector<2x1x128xf32>
    %50 = tpu.concatenate %34, %36, %38, %41, %43, %45, %48, %49 in 1 : vector<2x1x128xf32>, vector<2x1x128xf32>, vector<2x1x128xf32>, vector<2x1x128xf32>, vector<2x1x128xf32>, vector<2x1x128xf32>, vector<2x1x128xf32>, vector<2x1x128xf32> -> vector<2x8x128xf32>
    %c0_20 = arith.constant 0 : index
    %c0_21 = arith.constant 0 : index
    %c0_22 = arith.constant 0 : index
    %c0_23 = arith.constant 0 : index
    %51 = vector.load %arg3[%c0_20, %c0_21, %c0_22, %c0_23] : memref<2x1x8x128xf32, #tpu.memory_space<vmem>>, vector<2x1x8x128xf32>
    %52 = vector.shape_cast %51 : vector<2x1x8x128xf32> to vector<2x8x128xf32>
    %53 = vector.shape_cast %50 : vector<2x8x128xf32> to vector<2x1x8x128xf32>
    tpu.vector_store %arg3[%c0_20, %c0_21, %c0_22, %c0_23], %53 {strides = array<i32>} : memref<2x1x8x128xf32, #tpu.memory_space<vmem>>, vector<2x1x8x128xf32>,
    return
  }
  func.func @transform_0(%arg0: i32) -> (i32, i32, i32) {
    %c0_i32 = arith.constant 0 : i32
    %c0_i32_0 = arith.constant 0 : i32
    %c0_i32_1 = arith.constant 0 : i32
    return %arg0, %c0_i32, %c0_i32_0 : i32, i32, i32
  }
  func.func @transform_1(%arg0: i32) -> (i32, i32, i32) {
    %c0_i32 = arith.constant 0 : i32
    %c0_i32_0 = arith.constant 0 : i32
    %c0_i32_1 = arith.constant 0 : i32
    return %arg0, %c0_i32, %c0_i32_0 : i32, i32, i32
  }
  func.func @transform_2(%arg0: i32) -> (i32, i32, i32, i32) {
    %c0_i32 = arith.constant 0 : i32
    %c0_i32_0 = arith.constant 0 : i32
    %c0_i32_1 = arith.constant 0 : i32
    %c0_i32_2 = arith.constant 0 : i32
    return %arg0, %c0_i32, %c0_i32_0, %c0_i32_1 : i32, i32, i32, i32
  }
}

</mosaic_0001>

<llo_original>
// kernel: tpu_custom_call.1
$region0: #{tpu_custom_call.1}
  #allocation0 [shape = 'u32[]', space=smem, size = 0x4, offset = 0x4, fixed_abs, tag = 'smem constant byte address 0x4 - core index']
  #allocation1 [shape = 'u32[144,128]{1,0:T(1,128)}', space=vmem, size = 0x12000, scoped, tag = 'internal scratch']
  %s0 = inlined_call_operand.hbm [shape: f32[2,2,128], index: 0, kind: input, shape index: {}]
  %s1 = inlined_call_operand.hbm [shape: f32[2,2,128], index: 1, kind: input, shape index: {}]
  %s2 = inlined_call_operand.hbm [shape: f32[2,1,8,128], index: 2, kind: output, shape index: {}]
  %s3 = sld [smem:[#allocation0]]
  $region26: #{tpu_custom_call.1} parent=0
    _
  %s5 = ssub.s32 1, %s3
  %s6 = scalar_select 0, %s5, %s3
  $region1: #{tpu_custom_call.1} parent=0
    #allocation2 [shape = 'u8[2048]{0}', space=vmem, size = 0x800, scoped, tag = 'input window, operand 0, single buffered']
    #allocation3 [shape = 's32[1]{0}', space=sflag, size = 0x4, scoped, tag = 'scoped memory for tpu_custom_call.1']
    #allocation4 [shape = 's32[1]{0}', space=sflag, size = 0x4, scoped, tag = 'scoped memory for tpu_custom_call.1']
    #allocation5 [shape = 'u8[2048]{0}', space=vmem, size = 0x800, scoped, tag = 'input window, operand 1, single buffered']
    #allocation6 [shape = 's32[1]{0}', space=sflag, size = 0x4, scoped, tag = 'scoped memory for tpu_custom_call.1']
    #allocation7 [shape = 'u8[8192]{0}', space=vmem, size = 0x2000, scoped, tag = 'output window, operand 0, single buffered']
    %7 = vsyncpa [#allocation3], 0
    %8 = vsyncpa [#allocation6], 0
    %9 = vsyncpa [#allocation4], 0
    // Predicated region
    $region2: #{tpu_custom_call.1} parent=1 // pred_check
      _
    $region3: #{tpu_custom_call.1} parent=1 // pred_check_branch
      %11 = sbr.rel (0) target = $region5
    $region4: #{tpu_custom_call.1} parent=1 // pred_region
      %s13 = ssub.s32 64, 64
      %14 = vsyncadd [#allocation3], %s13
      %s15 = sshll.u32 [#allocation2], 4
      %s16 = int_to_ptr.vmem [resolvable:$true] %s15
      %21 = dma.hbm_to_vmem [thread:$0]  %s0, 64, %s16, [#allocation3], 32, 32, 2
    $region5: #{tpu_custom_call.1} parent=1 // pred_fallthru
      _
    // Predicated region
    $region6: #{tpu_custom_call.1} parent=1 // pred_check
      _
    $region7: #{tpu_custom_call.1} parent=1 // pred_check_branch
      %23 = sbr.rel (0) target = $region9
    $region8: #{tpu_custom_call.1} parent=1 // pred_region
      %s25 = ssub.s32 64, 64
      %26 = vsyncadd [#allocation6], %s25
      %s27 = sshll.u32 [#allocation5], 4
      %s28 = int_to_ptr.vmem [resolvable:$true] %s27
      %33 = dma.hbm_to_vmem [thread:$0]  %s1, 64, %s28, [#allocation6], 32, 32, 2
    $region9: #{tpu_custom_call.1} parent=1 // pred_fallthru
      _
    // Predicated region
    $region10: #{tpu_custom_call.1} parent=1 // pred_check
      _
    $region11: #{tpu_custom_call.1} parent=1 // pred_check_branch
      %35 = sbr.rel (0) target = $region13
    $region12: #{tpu_custom_call.1} parent=1 // pred_region
      %36 = dma.done [#allocation3], 64
    $region13: #{tpu_custom_call.1} parent=1 // pred_fallthru
      _
    // Predicated region
    $region14: #{tpu_custom_call.1} parent=1 // pred_check
      _
    $region15: #{tpu_custom_call.1} parent=1 // pred_check_branch
      %38 = sbr.rel (0) target = $region17
    $region16: #{tpu_custom_call.1} parent=1 // pred_region
      %39 = dma.done [#allocation6], 64
    $region17: #{tpu_custom_call.1} parent=1 // pred_fallthru
      _
    %v40 = vld [vmem:[#allocation2] sm:$0x3]
    %v41 = vld [vmem:[#allocation2 + $0x2] sm:$0x3]
    %v42 = vld [vmem:[#allocation5] sm:$0x3]
    %v43 = vld [vmem:[#allocation5 + $0x2] sm:$0x3]
    %v44 = vand.u32 2147483647, %v40
    %v45 = vand.u32 2147483647, %v41
    %v46 = vsub.f32 0.0, %v44
    %v47 = vsub.f32 0.0, %v45
    %v48 = vmul.f32 %v46, 1.442695
    %v49 = vpow.pop %v48
    %v50 = vmul.f32 %v47, 1.442695
    %v51 = vpow.pop %v50
    %v52 = vadd.f32 %v49, 1.0
    %v53 = vadd.f32 %v51, 1.0
    %v54 = vrcp.pop %v52
    %v55 = vrcp.pop %v53
    %v56 = vmul.f32 %v52, %v54
    %v57 = vmul.f32 %v53, %v55
    %v58 = vsub.f32 2.0, %v56
    %v59 = vsub.f32 2.0, %v57
    %v60 = vmul.f32 %v54, %v58
    %v61 = vmul.f32 %v55, %v59
    %vm62 = vcmp.ge.f32.partialorder %v40, 0.0
    %vm63 = vcmp.ge.f32.partialorder %v41, 0.0
    %v64 = vmul.f32 %v49, %v60
    %v65 = vmul.f32 %v51, %v61
    %v66 = vsel %vm62, %v60, %v64
    %v67 = vsel %vm63, %v61, %v65
    %v68 = vmax.f32 %v40, 0.0
    %v69 = vmax.f32 %v41, 0.0
    %v70 = vmul.f32 %v40, %v42
    %v71 = vmul.f32 %v41, %v43
    %v72 = vsub.f32 %v68, %v70
    %v73 = vsub.f32 %v69, %v71
    %v74 = vlog2.pop %v52
    %v75 = vmul.f32 %v74, 0.6931472
    %v76 = vlog2.pop %v53
    %v77 = vmul.f32 %v76, 0.6931472
    %v78 = vadd.f32 %v72, %v75
    %v79 = vadd.f32 %v73, %v77
    %vm80 = vcmp.eq.f32.partialorder %v42, 1.0
    %vm81 = vcmp.eq.f32.partialorder %v43, 1.0
    %v82 = vsub.f32 1.0, %v66
    %v83 = vsub.f32 1.0, %v67
    %v84 = vsel %vm80, %v66, %v82
    %v85 = vsel %vm81, %v67, %v83
    %v86 = vsub.f32 1.0, %v84
    %v87 = vsub.f32 1.0, %v85
    %v88 = vmul.f32 %v86, %v86
    %v89 = vmul.f32 %v87, %v87
    %v90 = vmul.f32 %v88, %v86
    %v91 = vmul.f32 %v89, %v87
    %v92 = vmul.f32 %v90, %v78
    %v93 = vmul.f32 %v91, %v79
    %vm94 = vcmask 1041408
    %v95 = vsel %vm94, %v66, inf
    %v96 = vrot.slane %v95, 4
    %v97 = vmin.f32 %v95, %v96
    %v98 = vrot.slane %v97, 2
    %v99 = vmin.f32 %v97, %v98
    %v100 = vrot.slane %v99, 1
    %v101 = vmin.f32 %v99, %v100
    %v102 = vsel %vm94, %v67, inf
    %v103 = vrot.slane %v102, 4
    %v104 = vmin.f32 %v102, %v103
    %v105 = vrot.slane %v104, 2
    %v106 = vmin.f32 %v104, %v105
    %v107 = vrot.slane %v106, 1
    %v108 = vmin.f32 %v106, %v107
    %v109 = vsel %vm94, %v66, -inf
    %v110 = vrot.slane %v109, 4
    %v111 = vmax.f32 %v109, %v110
    %v112 = vrot.slane %v111, 2
    %v113 = vmax.f32 %v111, %v112
    %v114 = vrot.slane %v113, 1
    %v115 = vmax.f32 %v113, %v114
    %v116 = vsel %vm94, %v67, -inf
    %v117 = vrot.slane %v116, 4
    %v118 = vmax.f32 %v116, %v117
    %v119 = vrot.slane %v118, 2
    %v120 = vmax.f32 %v118, %v119
    %v121 = vrot.slane %v120, 1
    %v122 = vmax.f32 %v120, %v121
    %v123 = vsel %vm94, %v66, 0.0
    %v124 = vrot.slane %v123, 4
    %v125 = vadd.f32 %v123, %v124
    %v126 = vrot.slane %v125, 2
    %v127 = vadd.f32 %v125, %v126
    %v128 = vrot.slane %v127, 1
    %v129 = vadd.f32 %v127, %v128
    %v130 = vsel %vm94, %v67, 0.0
    %v131 = vrot.slane %v130, 4
    %v132 = vadd.f32 %v130, %v131
    %v133 = vrot.slane %v132, 2
    %v134 = vadd.f32 %v132, %v133
    %v135 = vrot.slane %v134, 1
    %v136 = vadd.f32 %v134, %v135
    %v137 = vmul.f32 %v66, %v42
    %v138 = vmul.f32 %v67, %v43
    %v139 = vsel %vm94, %v137, 0.0
    %v140 = vrot.slane %v139, 4
    %v141 = vadd.f32 %v139, %v140
    %v142 = vrot.slane %v141, 2
    %v143 = vadd.f32 %v141, %v142
    %v144 = vrot.slane %v143, 1
    %v145 = vadd.f32 %v143, %v144
    %v146 = vsel %vm94, %v138, 0.0
    %v147 = vrot.slane %v146, 4
    %v148 = vadd.f32 %v146, %v147
    %v149 = vrot.slane %v148, 2
    %v150 = vadd.f32 %v148, %v149
    %v151 = vrot.slane %v150, 1
    %v152 = vadd.f32 %v150, %v151
    %v153 = vsel %vm94, %v42, 0.0
    %v154 = vrot.slane %v153, 4
    %v155 = vadd.f32 %v153, %v154
    %v156 = vrot.slane %v155, 2
    %v157 = vadd.f32 %v155, %v156
    %v158 = vrot.slane %v157, 1
    %v159 = vadd.f32 %v157, %v158
    %v160 = vsel %vm94, %v43, 0.0
    %v161 = vrot.slane %v160, 4
    %v162 = vadd.f32 %v160, %v161
    %v163 = vrot.slane %v162, 2
    %v164 = vadd.f32 %v162, %v163
    %v165 = vrot.slane %v164, 1
    %v166 = vadd.f32 %v164, %v165
    %v167 = vsel %vm94, %v92, 0.0
    %v168 = vrot.slane %v167, 4
    %v169 = vadd.f32 %v167, %v168
    %v170 = vrot.slane %v169, 2
    %v171 = vadd.f32 %v169, %v170
    %v172 = vrot.slane %v171, 1
    %v173 = vadd.f32 %v171, %v172
    %v174 = vsel %vm94, %v93, 0.0
    %v175 = vrot.slane %v174, 4
    %v176 = vadd.f32 %v174, %v175
    %v177 = vrot.slane %v176, 2
    %v178 = vadd.f32 %v176, %v177
    %v179 = vrot.slane %v178, 1
    %v180 = vadd.f32 %v178, %v179
    %v181 = vmul.f32 %v92, %v42
    %v182 = vmul.f32 %v93, %v43
    %v183 = vsel %vm94, %v181, 0.0
    %v184 = vrot.slane %v183, 4
    %v185 = vadd.f32 %v183, %v184
    %v186 = vrot.slane %v185, 2
    %v187 = vadd.f32 %v185, %v186
    %v188 = vrot.slane %v187, 1
    %v189 = vadd.f32 %v187, %v188
    %v190 = vsel %vm94, %v182, 0.0
    %v191 = vrot.slane %v190, 4
    %v192 = vadd.f32 %v190, %v191
    %v193 = vrot.slane %v192, 2
    %v194 = vadd.f32 %v192, %v193
    %v195 = vrot.slane %v194, 1
    %v196 = vadd.f32 %v194, %v195
    %vm197 = vcmask 1040384
    %v198 = vsel %vm197, %v101, %v115
    %v199 = vsel %vm197, %v108, %v122
    %v200 = vsel %vm94, %v198, %v129
    %v201 = vsel %vm94, %v199, %v136
    %vm202 = vcmask 1042432
    %v203 = vsel %vm202, %v200, %v145
    %v204 = vsel %vm202, %v201, %v152
    %vm205 = vcmask 1043456
    %v206 = vsel %vm205, %v203, %v159
    %v207 = vsel %vm205, %v204, %v166
    %vm208 = vcmask 1044480
    %v209 = vsel %vm208, %v206, %v173
    %v210 = vsel %vm208, %v207, %v180
    %vm211 = vcmask 1045504
    %v212 = vsel %vm211, %v209, %v189
    %v213 = vsel %vm211, %v210, %v196
    %vm214 = vcmask 1046528
    %v215 = vsel %vm214, %v212, 0.0
    %v216 = vsel %vm214, %v213, 0.0
    %217 = vst [vmem:[#allocation7] sm:$0xff] %v215
    %218 = vst [vmem:[#allocation7 + $0x8] sm:$0xff] %v216
    // Predicated region
    $region18: #{tpu_custom_call.1} parent=1 // pred_check
      _
    $region19: #{tpu_custom_call.1} parent=1 // pred_check_branch
      %220 = sbr.rel (0) target = $region21
    $region20: #{tpu_custom_call.1} parent=1 // pred_region
      %s222 = ssub.s32 256, 256
      %223 = vsyncadd [#allocation4], %s222
      %s224 = sshll.u32 [#allocation7], 4
      %s225 = int_to_ptr.vmem [resolvable:$true] %s224
      %230 = dma.vmem_to_hbm [thread:$0]  %s225, 256, %s2, [#allocation4], 128, 128, 8
    $region21: #{tpu_custom_call.1} parent=1 // pred_fallthru
      _
    // Predicated region
    $region22: #{tpu_custom_call.1} parent=1 // pred_check
      _
    $region23: #{tpu_custom_call.1} parent=1 // pred_check_branch
      %232 = sbr.rel (0) target = $region25
    $region24: #{tpu_custom_call.1} parent=1 // pred_region
      %233 = dma.done [#allocation4], 256
    $region25: #{tpu_custom_call.1} parent=1 // pred_fallthru
      _
    %234 = vsyncpa [#allocation3], 1
    %235 = vsyncpa [#allocation6], 1
    %236 = vsyncpa [#allocation4], 1

</llo_original>
